<compile_context>
chip_gen: v5e
topology: v5e:2x2
jax: 0.10.0
libtpu: 0.0.40
codegen_flags: <defaults>
</compile_context>

<pallas_src>
import math

import jax
import jax.numpy as jnp
from jax.experimental import pallas as pl
from jax.experimental.pallas import tpu as pltpu

_LANE = 128
_MIB = 1024 * 1024


def _dtype_min(dtype):
    """Identity element of `max` for this dtype (Python scalar, weak-typed)."""
    dtype = jnp.dtype(dtype)
    if jnp.issubdtype(dtype, jnp.floating):
        return float("-inf")
    if dtype == jnp.dtype(jnp.bool_):
        return False
    return int(jnp.iinfo(dtype).min)


def _sublane(itemsize):
    # Sublane packing granularity per dtype width (f32:8, bf16:16, int8:32).
    return {4: 8, 2: 16, 1: 32}.get(itemsize, 8)


def _round_down(x, m):
    return (x // m) * m


def _budgets(block_bytes=None):
    """Per-block byte target and scoped-VMEM limit, sized from the device."""
    try:
        vmem_phys = int(pltpu.get_tpu_info().vmem_capacity_bytes)
    except Exception:
        vmem_phys = 64 * _MIB  # conservative (v7x per-TC)
    # ~70% of physical, capped at 64 MiB (v5e/v6e), floored at 32 MiB.
    vmem_limit = min(int(vmem_phys * 0.7), 64 * _MIB)
    vmem_limit = max(vmem_limit, 32 * _MIB)
    vmem_limit = (vmem_limit // _MIB) * _MIB
    if block_bytes is None:
        # Double-buffered input (2x) plus the resident output must fit.
        block_bytes = max(min(12 * _MIB, vmem_limit // 4), 1 * _MIB)
    return block_bytes, vmem_limit


# ---------------------------------------------------------------------------
# General path: x viewed as (outer, red, inner), reduce over the middle axis.
# ---------------------------------------------------------------------------
def _max_mid_axis(x3, block_bytes, vmem_limit):
    outer, red, inner = x3.shape
    dtype = x3.dtype
    itemsize = dtype.itemsize
    sub = _sublane(itemsize)
    min_val = _dtype_min(dtype)

    # --- tile selection: reduction depth first (perf review) ---------------
    # Lane tile: full extent if small, else 512 (partial tail lane blocks are
    # safe: out-of-bounds input lanes only ever feed out-of-bounds output
    # lanes, which Pallas drops on writeback). This also caps block bytes for
    # large, non-128-aligned `inner`.
    ti = inner if inner <= 512 else 512

    # Minimal output-sublane tile used for budgeting.
    to_min = outer if outer <= sub else sub

    # Reduction tile: as deep as the budget allows, floor ~64 rows (multiple
    # of `sub`) so the cross-sublane XLU collapse is amortized ~8x.
    row_bytes = max(to_min * ti * itemsize, 1)
    tr_fit = _round_down(block_bytes // row_bytes, sub)
    tr = min(red, max(tr_fit, min(red, 64)))
    needs_mask = (red % tr) != 0

    # Output sublane tile: spend remaining budget; multiple of `sub` or full.
    if outer <= sub:
        to = outer
    else:
        to_budget = block_bytes // max(tr * ti * itemsize, 1)
        to = max(sub, _round_down(min(to_budget, 512), sub))
        if to >= outer:
            to = outer

    grid_o = pl.cdiv(outer, to)
    grid_i = pl.cdiv(inner, ti)
    grid_r = pl.cdiv(red, tr)

    # v7x megacore: if the whole output is a single block, split the
    # reduction into two parallel halves (evenly, at block granularity).
    nsplit = 2 if (grid_o * grid_i == 1 and grid_r >= 2 and grid_r % 2 == 0) else 1
    grid_r_per = grid_r // nsplit

    def kernel(x_ref, o_ref):
        s = pl.program_id(0)
        r = pl.program_id(3)

        def accum(blk):
            @pl.when(r == 0)
            def _():
                o_ref[...] = blk          # first step: direct store, no init fill

            @pl.when(r > 0)
            def _():
                o_ref[...] = jnp.maximum(o_ref[...], blk)

        x = x_ref[...]                    # (to, tr, ti)

        if not needs_mask:
            accum(jnp.max(x, axis=1))
        else:
            gr = s * grid_r_per + r       # global reduction-block index
            is_last = gr == grid_r - 1

            @pl.when(jnp.logical_not(is_last))
            def _():
                accum(jnp.max(x, axis=1))

            @pl.when(is_last)
            def _():
                lim = red - gr * tr
                row = jax.lax.broadcasted_iota(jnp.int32, (tr, ti), 0)
                xm = jnp.where(row[None, :, :] < lim, x, min_val)
                accum(jnp.max(xm, axis=1))

    cost = pl.CostEstimate(
        flops=outer * red * inner,
        transcendentals=0,
        bytes_accessed=(outer * red * inner + nsplit * outer * inner) * itemsize,
    )
    out = pl.pallas_call(
        kernel,
        out_shape=jax.ShapeDtypeStruct((nsplit, outer, inner), dtype),
        grid_spec=pltpu.PrefetchScalarGridSpec(
            num_scalar_prefetch=0,
            grid=(nsplit, grid_o, grid_i, grid_r_per),
            in_specs=[pl.BlockSpec(
                (to, tr, ti),
                lambda s, o, i, r: (o, s * grid_r_per + r, i))],
            out_specs=pl.BlockSpec(
                (None, to, ti),
                lambda s, o, i, r: (s, o, i)),
        ),
        compiler_params=pltpu.CompilerParams(
            dimension_semantics=("parallel", "parallel", "parallel", "arbitrary"),
            vmem_limit_bytes=vmem_limit,
        ),
        cost_estimate=cost,
    )(x3)
    if nsplit > 1:
        return jnp.max(out, axis=0)
    return out[0]


# ---------------------------------------------------------------------------
# Last-axis path: x viewed as (g, 128, red), reduce over the last axis so the
# output block (bg, 128) is lane-dense. Deep `tr` keeps cross-lane XLU work
# amortized; small `bg` (= sublane packing) leaves budget for deep tr.
# ---------------------------------------------------------------------------
def _max_last_axis(x2, block_bytes, vmem_limit):
    outer, red = x2.shape                 # outer % 128 == 0 (caller guarantees)
    dtype = x2.dtype
    itemsize = dtype.itemsize
    sub = _sublane(itemsize)
    min_val = _dtype_min(dtype)
    g = outer // _LANE
    x3 = x2.reshape(g, _LANE, red)

    bg = g if g < sub else sub            # small bg -> deep tr (XLU amortization)
    row_bytes = bg * _LANE * itemsize
    tr_fit = _round_down(block_bytes // row_bytes, _LANE)
    tr = min(red, max(tr_fit, 512))       # floor 512 lanes (multiple of 128) or full
    needs_mask = (red % tr) != 0

    grid_g = pl.cdiv(g, bg)
    grid_r = pl.cdiv(red, tr)
    nsplit = 2 if (grid_g == 1 and grid_r >= 2 and grid_r % 2 == 0) else 1
    grid_r_per = grid_r // nsplit

    def kernel(x_ref, o_ref):
        s = pl.program_id(0)
        r = pl.program_id(2)

        def accum(blk):
            @pl.when(r == 0)
            def _():
                o_ref[...] = blk

            @pl.when(r > 0)
            def _():
                o_ref[...] = jnp.maximum(o_ref[...], blk)

        x = x_ref[...]                    # (bg, 128, tr)

        if not needs_mask:
            accum(jnp.max(x, axis=2))
        else:
            gr = s * grid_r_per + r
            is_last = gr == grid_r - 1

            @pl.when(jnp.logical_not(is_last))
            def _():
                accum(jnp.max(x, axis=2))

            @pl.when(is_last)
            def _():
                lim = red - gr * tr
                col = jax.lax.broadcasted_iota(jnp.int32, (_LANE, tr), 1)
                xm = jnp.where(col[None, :, :] < lim, x, min_val)
                accum(jnp.max(xm, axis=2))

    cost = pl.CostEstimate(
        flops=outer * red,
        transcendentals=0,
        bytes_accessed=(outer * red + nsplit * outer) * itemsize,
    )
    out = pl.pallas_call(
        kernel,
        out_shape=jax.ShapeDtypeStruct((nsplit, g, _LANE), dtype),
        grid_spec=pltpu.PrefetchScalarGridSpec(
            num_scalar_prefetch=0,
            grid=(nsplit, grid_g, grid_r_per),
            in_specs=[pl.BlockSpec(
                (bg, _LANE, tr),
                lambda s, gi, r: (gi, 0, s * grid_r_per + r))],
            out_specs=pl.BlockSpec(
                (None, bg, _LANE),
                lambda s, gi, r: (s, gi, 0)),
        ),
        compiler_params=pltpu.CompilerParams(
            dimension_semantics=("parallel", "parallel", "arbitrary"),
            vmem_limit_bytes=vmem_limit,
        ),
        cost_estimate=cost,
    )(x3)
    if nsplit > 1:
        out = jnp.max(out, axis=0)
    else:
        out = out[0]
    return out.reshape(outer)


# ---------------------------------------------------------------------------
# Public wrapper: Pallas equivalent of nnMax(dim, keepdim)(x) -> max values.
# ---------------------------------------------------------------------------
def nn_max(x, dim, keepdim, *, block_bytes=None):
    ndim = x.ndim
    dim = dim % ndim
    shape = x.shape
    outer = math.prod(shape[:dim])
    red = shape[dim]
    inner = math.prod(shape[dim + 1:])

    if keepdim:
        out_shape = shape[:dim] + (1,) + shape[dim + 1:]
    else:
        out_shape = shape[:dim] + shape[dim + 1:]

    bb, vmem_limit = _budgets(block_bytes)

    if inner == 1 and outer >= _LANE:
        # Last-axis reduction -> lane-dense output path. Pad `outer` up to a
        # multiple of 128 if needed (padded rows are discarded afterwards);
        # this avoids the lane-width-1 masked-store penalty of the general
        # path at the cost of one extra (small) HBM copy of the input.
        x2 = x.reshape(outer, red)
        pad = (-outer) % _LANE
        if pad:
            x2 = jnp.pad(x2, ((0, pad), (0, 0)))
        out_flat = _max_last_axis(x2, bb, vmem_limit)[:outer]
        return out_flat.reshape(out_shape)

    # General path (also covers inner == 1 with small `outer`).
    out2 = _max_mid_axis(x.reshape(outer, red, inner), bb, vmem_limit)
    return out2.reshape(out_shape)


if __name__ == "__main__":
    key = jax.random.PRNGKey(0)
    k1, k2, k3, k4, k5, k6 = jax.random.split(key, 6)

    # 1) The module's intended use: NCHW feature map, reduce over channels.
    x1 = jax.random.normal(k1, (2, 4, 16, 16), dtype=jnp.float32)
    out1 = jax.block_until_ready(nn_max(x1, dim=1, keepdim=True))
    ref1 = jnp.max(x1, axis=1, keepdims=True)
    assert out1.shape == ref1.shape, (out1.shape, ref1.shape)
    assert jnp.array_equal(out1, ref1), "mismatch (mid-axis path)"

    # 2) Last-axis reduction -> lane-dense output path (outer % 128 == 0).
    x2 = jax.random.normal(k2, (2, 128, 8), dtype=jnp.float32)
    out2 = jax.block_until_ready(nn_max(x2, dim=-1, keepdim=False))
    ref2 = jnp.max(x2, axis=-1)
    assert out2.shape == ref2.shape, (out2.shape, ref2.shape)
    assert jnp.array_equal(out2, ref2), "mismatch (last-axis path)"

    # 3) Last-axis reduction with outer padded to a multiple of 128.
    x3 = jax.random.normal(k3, (4, 50, 5), dtype=jnp.float32)
    out3 = jax.block_until_ready(nn_max(x3, dim=2, keepdim=True))
    ref3 = jnp.max(x3, axis=2, keepdims=True)
    assert out3.shape == ref3.shape, (out3.shape, ref3.shape)
    assert jnp.array_equal(out3, ref3), "mismatch (last-axis padded path)"

    # 4) Chunked mid-axis reduction: small forced block size exercises the
    #    running-max accumulator, last-block tail masking and the 2-way
    #    parallel reduction split.
    x4 = jax.random.normal(k4, (8, 200, 128), dtype=jnp.float32)
    out4 = jax.block_until_ready(nn_max(x4, dim=1, keepdim=False, block_bytes=65536))
    ref4 = jnp.max(x4, axis=1)
    assert out4.shape == ref4.shape, (out4.shape, ref4.shape)
    assert jnp.array_equal(out4, ref4), "mismatch (chunked mid-axis path)"

    # 5) bf16 exercises dtype-aware sublane packing (sub = 16).
    x5 = jax.random.normal(k5, (16, 300, 256), dtype=jnp.bfloat16)
    out5 = jax.block_until_ready(nn_max(x5, dim=1, keepdim=False))
    ref5 = jnp.max(x5, axis=1)
    assert out5.shape == ref5.shape, (out5.shape, ref5.shape)
    assert jnp.array_equal(out5, ref5), "mismatch (bf16 mid-axis path)"

    # 6) Chunked last-axis reduction: deep lane tiles, tail masking and the
    #    parallel reduction split on the lane-dense path.
    x6 = jax.random.normal(k6, (128, 2000), dtype=jnp.float32)
    out6 = jax.block_until_ready(nn_max(x6, dim=1, keepdim=False, block_bytes=131072))
    ref6 = jnp.max(x6, axis=1)
    assert out6.shape == ref6.shape, (out6.shape, ref6.shape)
    assert jnp.array_equal(out6, ref6), "mismatch (chunked last-axis path)"

    print("KERNEL_OK")
</pallas_src>

<mosaic_0001>
module attributes {stable_mosaic.version = 11 : i64} {
  func.func @kernel(%arg0: i32, %arg1: i32, %arg2: i32, %arg3: i32, %arg4: memref<2x4x256xf32, #tpu.memory_space<vmem>>, %arg5: memref<1x2x256xf32, #tpu.memory_space<vmem>>) attributes {dimension_semantics = [#tpu.dimension_semantics<parallel>, #tpu.dimension_semantics<parallel>, #tpu.dimension_semantics<parallel>, #tpu.dimension_semantics<arbitrary>], iteration_bounds = array<i64: 1, 1, 1, 1>, scalar_prefetch = 0 : i64, scratch_operands = 0 : i64, tpu.core_type = #tpu.core_type<tc>, window_params = [{transform_indices = @transform_0, window_bounds = array<i64: 2, 4, 256>}, {transform_indices = @transform_1, window_bounds = array<i64: 1, 2, 256>}]} {
    %c0 = arith.constant 0 : index
    %c0_0 = arith.constant 0 : index
    %c0_1 = arith.constant 0 : index
    %0 = vector.load %arg4[%c0, %c0_0, %c0_1] : memref<2x4x256xf32, #tpu.memory_space<vmem>>, vector<2x4x256xf32>
    %cst = arith.constant dense<0xFF800000> : vector<2x256xf32>
    %1 = vector.multi_reduction <maximumf>, %0, %cst [1] : vector<2x4x256xf32> to vector<2x256xf32>
    %c0_i32 = arith.constant 0 : i32
    %2 = arith.cmpi eq, %arg3, %c0_i32 : i32
    %3 = arith.extui %2 : i1 to i32
    %c0_i32_2 = arith.constant 0 : i32
    %4 = arith.cmpi ne, %3, %c0_i32_2 : i32
    scf.if %4 {
      %c0_5 = arith.constant 0 : index
      %c0_6 = arith.constant 0 : index
      %c0_7 = arith.constant 0 : index
      %8 = vector.load %arg5[%c0_5, %c0_6, %c0_7] : memref<1x2x256xf32, #tpu.memory_space<vmem>>, vector<1x2x256xf32>
      %9 = vector.shape_cast %8 : vector<1x2x256xf32> to vector<2x256xf32>
      %10 = vector.shape_cast %1 : vector<2x256xf32> to vector<1x2x256xf32>
      tpu.vector_store %arg5[%c0_5, %c0_6, %c0_7], %10 {strides = array<i32>} : memref<1x2x256xf32, #tpu.memory_space<vmem>>, vector<1x2x256xf32>,
    } else {
    }
    %c0_i32_3 = arith.constant 0 : i32
    %5 = arith.cmpi sgt, %arg3, %c0_i32_3 : i32
    %6 = arith.extui %5 : i1 to i32
    %c0_i32_4 = arith.constant 0 : i32
    %7 = arith.cmpi ne, %6, %c0_i32_4 : i32
    scf.if %7 {
      %c0_5 = arith.constant 0 : index
      %c0_6 = arith.constant 0 : index
      %c0_7 = arith.constant 0 : index
      %8 = vector.load %arg5[%c0_5, %c0_6, %c0_7] : memref<1x2x256xf32, #tpu.memory_space<vmem>>, vector<1x2x256xf32>
      %9 = vector.shape_cast %8 : vector<1x2x256xf32> to vector<2x256xf32>
      %10 = arith.maximumf %9, %1 : vector<2x256xf32>
      %c0_8 = arith.constant 0 : index
      %c0_9 = arith.constant 0 : index
      %c0_10 = arith.constant 0 : index
      %11 = vector.load %arg5[%c0_8, %c0_9, %c0_10] : memref<1x2x256xf32, #tpu.memory_space<vmem>>, vector<1x2x256xf32>
      %12 = vector.shape_cast %11 : vector<1x2x256xf32> to vector<2x256xf32>
      %13 = vector.shape_cast %10 : vector<2x256xf32> to vector<1x2x256xf32>
      tpu.vector_store %arg5[%c0_8, %c0_9, %c0_10], %13 {strides = array<i32>} : memref<1x2x256xf32, #tpu.memory_space<vmem>>, vector<1x2x256xf32>,
    } else {
    }
    return
  }
  func.func @transform_0(%arg0: i32, %arg1: i32, %arg2: i32, %arg3: i32) -> (i32, i32, i32) {
    %c1_i32 = arith.constant 1 : i32
    %0 = arith.muli %arg0, %c1_i32 : i32
    %1 = arith.addi %0, %arg3 : i32
    %c0_i32 = arith.constant 0 : i32
    return %arg1, %1, %arg2 : i32, i32, i32
  }
  func.func @transform_1(%arg0: i32, %arg1: i32, %arg2: i32, %arg3: i32) -> (i32, i32, i32) {
    %c0_i32 = arith.constant 0 : i32
    return %arg0, %arg1, %arg2 : i32, i32, i32
  }
}

</mosaic_0001>

<llo_original>
// kernel: tpu_custom_call.1
$region0: #{tpu_custom_call.1}
  #allocation0 [shape = 'u32[]', space=smem, size = 0x4, offset = 0x4, fixed_abs, tag = 'smem constant byte address 0x4 - core index']
  #allocation1 [shape = 'u32[72,128]{1,0:T(1,128)}', space=vmem, size = 0x9000, scoped, tag = 'internal scratch']
  %s0 = inlined_call_operand.hbm [shape: f32[2,4,256], index: 0, kind: input, shape index: {}]
  %s1 = inlined_call_operand.hbm [shape: f32[1,2,256], index: 1, kind: output, shape index: {}]
  %s2 = sld [smem:[#allocation0]]
  $region26: #{tpu_custom_call.1} parent=0
    _
  %s4 = ssub.s32 1, %s2
  %s5 = scalar_select 0, %s4, %s2
  $region1: #{tpu_custom_call.1} parent=0
    #allocation2 [shape = 'u8[8192]{0}', space=vmem, size = 0x2000, scoped, tag = 'input window, operand 0, single buffered']
    #allocation3 [shape = 's32[1]{0}', space=sflag, size = 0x4, scoped, tag = 'scoped memory for tpu_custom_call.1']
    #allocation4 [shape = 's32[1]{0}', space=sflag, size = 0x4, scoped, tag = 'scoped memory for tpu_custom_call.1']
    #allocation5 [shape = 'u8[2048]{0}', space=vmem, size = 0x800, scoped, tag = 'output window, operand 0, single buffered']
    %6 = vsyncpa [#allocation3], 0
    %7 = vsyncpa [#allocation4], 0
    // Predicated region
    $region2: #{tpu_custom_call.1} parent=1 // pred_check
      _
    $region3: #{tpu_custom_call.1} parent=1 // pred_check_branch
      %9 = sbr.rel (0) target = $region5
    $region4: #{tpu_custom_call.1} parent=1 // pred_region
      %s10 = sadd.s32 0, 0
      %12 = vsyncadd [#allocation3], 0
      %s13 = smul.addr %s10, 2
      %s14 = smul.addr %s13, 4
      %s15 = scalar_lea.hbm %s0, %s14
      %s16 = sshll.u32 %s15, 4
      %s17 = int_to_ptr.hbm [resolvable:$true] %s16
      %s18 = sshll.u32 [#allocation2], 4
      %s19 = int_to_ptr.vmem [resolvable:$true] %s18
      %24 = dma.hbm_to_vmem [thread:$0]  %s17, 256, %s19, [#allocation3], 128, 128, 8
    $region5: #{tpu_custom_call.1} parent=1 // pred_fallthru
      _
    // Predicated region
    $region6: #{tpu_custom_call.1} parent=1 // pred_check
      _
    $region7: #{tpu_custom_call.1} parent=1 // pred_check_branch
      %26 = sbr.rel (0) target = $region9
    $region8: #{tpu_custom_call.1} parent=1 // pred_region
      %28 = dma.done [#allocation3], 256
    $region9: #{tpu_custom_call.1} parent=1 // pred_fallthru
      _
    %s29 = sadd.s32 0, 0
    %v30 = vld [vmem:[#allocation2] sm:$0xff]
    %v31 = vld [vmem:[#allocation2 + $0x8] sm:$0xff]
    %34 = vst [vmem:[#allocation1] ss:$2 sm:$0xff] %v30
    %v35 = vld.sshfl [vmem:[#allocation1] sm:$0xff pattern:$0x75316420]
    %v36 = vld.sshfl [vmem:[#allocation1 + $0x8] sm:$0xff pattern:$0x75316420]
    %s37 = scalar_lea.vmem [#allocation1], 16
    %38 = vst [vmem:[%s37] ss:$2 sm:$0xff] %v31
    %v39 = vld.sshfl [vmem:[#allocation1 + $0x10] sm:$0xff pattern:$0x75316420]
    %v40 = vld.sshfl [vmem:[#allocation1 + $0x18] sm:$0xff pattern:$0x75316420]
    %vm45 = vcmask 1043456
    %v46 = vsel %vm45, %v35, -inf
    %v47 = vrot.slane %v46, 4
    %v48 = vmax.f32 %v46, %v47
    %v49 = vrot.slane %v48, 2
    %v50 = vmax.f32 %v48, %v49
    %v51 = vrot.slane %v50, 1
    %v52 = vmax.f32 %v50, %v51
    %v53 = vsel %vm45, %v36, -inf
    %v54 = vrot.slane %v53, 4
    %v55 = vmax.f32 %v53, %v54
    %v56 = vrot.slane %v55, 2
    %v57 = vmax.f32 %v55, %v56
    %v58 = vrot.slane %v57, 1
    %v59 = vmax.f32 %v57, %v58
    %v60 = vsel %vm45, %v39, -inf
    %v61 = vrot.slane %v60, 4
    %v62 = vmax.f32 %v60, %v61
    %v63 = vrot.slane %v62, 2
    %v64 = vmax.f32 %v62, %v63
    %v65 = vrot.slane %v64, 1
    %v66 = vmax.f32 %v64, %v65
    %v67 = vsel %vm45, %v40, -inf
    %v68 = vrot.slane %v67, 4
    %v69 = vmax.f32 %v67, %v68
    %v70 = vrot.slane %v69, 2
    %v71 = vmax.f32 %v69, %v70
    %v72 = vrot.slane %v71, 1
    %v73 = vmax.f32 %v71, %v72
    %p74 = scmp.eq.s32.totalorder 0, 0
    // Predicated region
    $region10: #{tpu_custom_call.1} parent=1 // pred_check
      %p75 = pneg %p74
    $region11: #{tpu_custom_call.1} parent=1 // pred_check_branch
      %77 = sbr.rel (%p75) target = $region13
    $region12: #{tpu_custom_call.1} parent=1 // pred_region
      %v82 = vrot.slane %v59, 6
      %v83 = vrot.slane %v73, 6
      %vm84 = vcmask 1041408
      %v85 = vsel %vm84, %v52, %v82
      %v86 = vsel %vm84, %v66, %v83
      %vm87 = vcmask 1044484
      %v88 = vsel %vm87, %v85, %v85
      %vm89 = vcmask 1046534
      %v90 = vsel %vm89, %v85, %v88
      %v91 = vrot.slane %v86, 7
      %vm92 = vcmask 1041409
      %v93 = vsel %vm92, %v91, %v90
      %vm94 = vcmask 1043459
      %v95 = vsel %vm94, %v91, %v93
      %vm96 = vcmask 1045509
      %v97 = vsel %vm96, %v91, %v95
      %vm98 = vcmask 1047559
      %v99 = vsel %vm98, %v91, %v97
      %101 = vst [vmem:[#allocation5] sm:$0xf] %v99
    $region13: #{tpu_custom_call.1} parent=1 // pred_fallthru
      _
    %p102 = scmp.gt.s32.totalorder 0, 0
    // Predicated region
    $region14: #{tpu_custom_call.1} parent=1 // pred_check
      %p103 = pneg %p102
    $region15: #{tpu_custom_call.1} parent=1 // pred_check_branch
      %105 = sbr.rel (%p103) target = $region17
    $region16: #{tpu_custom_call.1} parent=1 // pred_region
      %v106 = vld [vmem:[#allocation5] sm:$0xf]
      %v111 = vrot.slane %v59, 6
      %v112 = vrot.slane %v73, 6
      %vm113 = vcmask 1041408
      %v114 = vsel %vm113, %v52, %v111
      %v115 = vsel %vm113, %v66, %v112
      %vm116 = vcmask 1044484
      %v117 = vsel %vm116, %v114, %v114
      %vm118 = vcmask 1046534
      %v119 = vsel %vm118, %v114, %v117
      %v120 = vrot.slane %v115, 7
      %vm121 = vcmask 1041409
      %v122 = vsel %vm121, %v120, %v119
      %vm123 = vcmask 1043459
      %v124 = vsel %vm123, %v120, %v122
      %vm125 = vcmask 1045509
      %v126 = vsel %vm125, %v120, %v124
      %vm127 = vcmask 1047559
      %v128 = vsel %vm127, %v120, %v126
      %v130 = vmax.f32 %v106, %v128
      %131 = vst [vmem:[#allocation5] sm:$0xf] %v130
    $region17: #{tpu_custom_call.1} parent=1 // pred_fallthru
      _
    // Predicated region
    $region18: #{tpu_custom_call.1} parent=1 // pred_check
      _
    $region19: #{tpu_custom_call.1} parent=1 // pred_check_branch
      %133 = sbr.rel (0) target = $region21
    $region20: #{tpu_custom_call.1} parent=1 // pred_region
      %135 = vsyncadd [#allocation4], 0
      %s137 = sshll.u32 [#allocation5], 4
      %s138 = int_to_ptr.vmem [resolvable:$true] %s137
      %s139 = sshll.u32 %s1, 4
      %s140 = int_to_ptr.hbm [resolvable:$true] %s139
      %142 = dma.vmem_to_hbm [thread:$0]  %s138, 64, %s140, [#allocation4]
    $region21: #{tpu_custom_call.1} parent=1 // pred_fallthru
      _
    // Predicated region
    $region22: #{tpu_custom_call.1} parent=1 // pred_check
      _
    $region23: #{tpu_custom_call.1} parent=1 // pred_check_branch
      %144 = sbr.rel (0) target = $region25
    $region24: #{tpu_custom_call.1} parent=1 // pred_region
      %146 = dma.done [#allocation4], 64
    $region25: #{tpu_custom_call.1} parent=1 // pred_fallthru
      _
    %147 = vsyncpa [#allocation3], 1
    %148 = vsyncpa [#allocation4], 1

</llo_original>
